<compile_context>
chip_gen: v7x
topology: tpu7x:2x2x1
jax: 0.10.0
libtpu: 0.0.40
codegen_flags: <defaults>
</compile_context>

<pallas_src>
import functools
from typing import NamedTuple, Optional

import jax
import jax.numpy as jnp
from jax.experimental import pallas as pl
from jax.experimental.pallas import tpu as pltpu


# ----------------------------- activation dispatch ---------------------------
_ACTIVATIONS = {
    None: lambda x: x,
    "": lambda x: x,
    "id": lambda x: x,
    "identity": lambda x: x,
    "tanh": jnp.tanh,
    "sigmoid": jax.nn.sigmoid,
    "relu": lambda x: jnp.maximum(x, 0.0),
    "exp": jnp.exp,
    "sin": jnp.sin,
    "cos": jnp.cos,
    "abs": jnp.abs,
    "erf": jax.lax.erf,
    "sqrt": jnp.sqrt,
    "log": jnp.log,
}
_TRANSCENDENTAL = {"tanh", "sigmoid", "exp", "sin", "cos", "erf", "sqrt", "log"}
# TODO(synk): extend dispatch for other torch.* activation names if needed
#             (the PyTorch module uses getattr(torch, activate_func) dynamically).

_LANE = 128
_TK_CAP = 2048   # largest single K block (fits comfortably in scoped VMEM on all gens)
_TM_CAP = 512
_TN_CAP = 512


def _round_up(x, m):
    return (x + m - 1) // m * m


def _get_activation(name):
    if name not in _ACTIVATIONS:
        raise NotImplementedError(
            f"activate_func={name!r} is not supported by the Pallas kernel")
    return _ACTIVATIONS[name]


def _pick_vmem_limit(footprint_bytes):
    """Generation-aware scoped-VMEM limit (headroom on v7x's 64 MiB/TC)."""
    phys = None
    try:
        phys = pltpu.get_tpu_info().vmem_capacity_bytes
    except Exception:  # query unavailable -> conservative (v7x-safe) default
        phys = None
    cap = (phys * 3) // 4 if phys else 48 * 1024 * 1024
    want = max(32 * 1024 * 1024, 2 * footprint_bytes)
    return int(max(min(want, cap), footprint_bytes + (4 << 20)))


# ----------------------------- parameter prep (one-time, cacheable) ----------
class DenseParams(NamedTuple):
    w_t: jax.Array                 # (Kp, Np) weight, transposed/padded/cast
    bias: Optional[jax.Array]      # (1, Np) or None
    in_dim: int                    # K
    out_dim: int                   # N
    padded_in: int                 # Kp
    padded_out: int                # Np


def prepare_dense_params(weight, bias=None, *, compute_dtype=None):
    """One-time prep of the PyTorch-layout (out, in) weight.

    Transposes to (K, N), casts to the MXU feed dtype (bf16 by default for f32
    weights), pads K only if K > _TK_CAP and ragged, and pads N to a lane-dense
    128 multiple when N is awkward (>128 and not a multiple of 128).
    """
    N, K = weight.shape
    if compute_dtype is None:
        compute_dtype = jnp.bfloat16 if weight.dtype == jnp.float32 else weight.dtype

    Kp = K if K <= _TK_CAP else _round_up(K, _LANE)
    Np = N if (N <= _LANE or N % _LANE == 0) else _round_up(N, _LANE)

    w_t = weight.T.astype(compute_dtype)          # (K, N)
    if (Kp, Np) != (K, N):
        w_t = jnp.pad(w_t, ((0, Kp - K), (0, Np - N)))

    b2 = None
    if bias is not None:
        b2 = bias.reshape(1, N)
        if Np != N:
            b2 = jnp.pad(b2, ((0, 0), (0, Np - N)))

    return DenseParams(w_t, b2, K, N, Kp, Np)


# ----------------------------- Pallas kernel --------------------------------
def _dense_kernel(*refs, act, use_bias, nk):
    # refs: x(tm,tk), w(tk,tn), [b(1,tn)], o(tm,tn), [acc(tm,tn) if nk > 1]
    x_ref, w_ref = refs[0], refs[1]
    pos = 2
    b_ref = None
    if use_bias:
        b_ref = refs[pos]
        pos += 1
    o_ref = refs[pos]
    pos += 1
    acc_ref = refs[pos] if nk > 1 else None

    x_t = x_ref[...]
    w_t = w_ref[...]
    if x_t.dtype != w_t.dtype:
        # In-kernel cast to the MXU feed dtype (e.g. f32 -> bf16): VPU-cheap,
        # avoids a wrapper-side HBM copy of x.
        x_t = x_t.astype(w_t.dtype)

    part = jnp.dot(x_t, w_t, preferred_element_type=jnp.float32)  # (tm, tn) f32

    if nk == 1:
        # Single K block: write straight through, no accumulator RMW traffic.
        if use_bias:
            part = part + b_ref[...].astype(jnp.float32)
        o_ref[...] = act(part).astype(o_ref.dtype)
    else:
        k = pl.program_id(2)

        @pl.when(k == 0)
        def _init():
            acc_ref[...] = jnp.zeros_like(acc_ref)

        acc_ref[...] += part

        @pl.when(k == nk - 1)
        def _finalize():
            acc = acc_ref[...]
            if use_bias:
                acc = acc + b_ref[...].astype(jnp.float32)
            o_ref[...] = act(acc).astype(o_ref.dtype)


# ----------------------------- forward ---------------------------------------
def dense_apply(x, params: DenseParams, activate_func="tanh", *,
                tm=None, tn=None, tk=None, k_buffer_depth=None):
    """y = act(x @ W.T + b) using prepared (cached) params."""
    act = _get_activation(activate_func)

    B, K = x.shape
    if K != params.in_dim:
        raise ValueError(f"shape mismatch: x {x.shape} vs input_dim {params.in_dim}")
    Kp, Np = params.padded_in, params.padded_out
    N = params.out_dim
    use_bias = params.bias is not None
    out_dtype = x.dtype

    # Rare case: huge ragged K (K > _TK_CAP and not a multiple of 128).
    if Kp != K:
        # TODO(synk): mask the ragged K tail in-kernel instead of this HBM copy.
        x = jnp.pad(x, ((0, 0), (0, Kp - K)))

    # --- tile selection (all (8,128)-legal: full dim or aligned multiple) ----
    if tm is None:
        tm = B if B <= _TM_CAP else _TM_CAP
    if tn is None:
        tn = Np if Np <= _TN_CAP else _TN_CAP
    if tk is None:
        if Kp <= _TK_CAP:
            tk = Kp
        else:  # Kp is a multiple of 128 here
            tk = next(c for c in range(_TK_CAP, 0, -_LANE) if Kp % c == 0)
    if Kp % tk:
        raise ValueError(f"tk={tk} does not divide padded K={Kp}")

    # v7x: make sure >=2 blocks exist along a 'parallel' axis so both
    # TensorCores get work (one extra grid step on 1-TC chips; negligible).
    if pl.cdiv(B, tm) == 1 and pl.cdiv(Np, tn) == 1:
        if tn >= 2 * _LANE and (tn // 2) % _LANE == 0:
            tn //= 2
        elif tm >= 16 and (tm // 2) % 8 == 0:
            tm //= 2

    nm, nn_, nk = pl.cdiv(B, tm), pl.cdiv(Np, tn), Kp // tk
    grid = (nm, nn_, nk)

    # --- specs ---------------------------------------------------------------
    spec_kwargs = {}
    if k_buffer_depth is not None and nk > 1:
        # Optional deeper K pipeline (e.g. 3) to hide exposed DMA at K-block
        # boundaries on mem-bound shapes; default 2-deep (no override).
        spec_kwargs["pipeline_mode"] = pl.Buffered(k_buffer_depth)

    in_specs = [
        pl.BlockSpec((tm, tk), lambda i, j, k: (i, k), **spec_kwargs),   # x tile
        pl.BlockSpec((tk, tn), lambda i, j, k: (k, j), **spec_kwargs),   # W (K,N) tile
    ]
    inputs = [x, params.w_t]
    if use_bias:
        in_specs.append(pl.BlockSpec((1, tn), lambda i, j, k: (0, j)))
        inputs.append(params.bias)

    scratch = [pltpu.VMEM((tm, tn), jnp.float32)] if nk > 1 else []

    kernel = functools.partial(_dense_kernel, act=act, use_bias=use_bias, nk=nk)

    # --- cost estimate (W streamed once per M block, x once per N block) -----
    x_bytes = B * Kp * x.dtype.itemsize * nn_
    w_bytes = Kp * Np * params.w_t.dtype.itemsize * nm
    o_bytes = B * Np * jnp.dtype(out_dtype).itemsize
    b_bytes = (Np * params.bias.dtype.itemsize * nm) if use_bias else 0
    cost = pl.CostEstimate(
        flops=2 * B * Kp * Np,
        transcendentals=(B * Np if activate_func in _TRANSCENDENTAL else 0),
        bytes_accessed=int(x_bytes + w_bytes + o_bytes + b_bytes),
    )

    # --- VMEM budget ----------------------------------------------------------
    depth = 2 if k_buffer_depth is None else max(2, k_buffer_depth)
    footprint = (depth * tm * tk * x.dtype.itemsize
                 + depth * tk * tn * params.w_t.dtype.itemsize
                 + 2 * tm * tn * jnp.dtype(out_dtype).itemsize
                 + (tm * tn * 4 if nk > 1 else 0)
                 + (2 * tn * params.bias.dtype.itemsize if use_bias else 0))
    vmem_limit = _pick_vmem_limit(footprint)

    y = pl.pallas_call(
        kernel,
        out_shape=jax.ShapeDtypeStruct((B, Np), out_dtype),
        grid=grid,
        in_specs=in_specs,
        out_specs=pl.BlockSpec((tm, tn), lambda i, j, k: (i, j)),
        scratch_shapes=scratch,
        compiler_params=pltpu.CompilerParams(
            dimension_semantics=("parallel", "parallel", "arbitrary"),
            vmem_limit_bytes=int(vmem_limit),
        ),
        cost_estimate=cost,
    )(*inputs)

    if Np != N:
        y = y[:, :N]
    return y


def dense_forward(x, weight, bias=None, activate_func="tanh", *,
                  compute_dtype=None, **tile_kwargs):
    """Convenience one-shot: prep params then apply (prep is cacheable)."""
    params = prepare_dense_params(weight, bias, compute_dtype=compute_dtype)
    return dense_apply(x, params, activate_func, **tile_kwargs)


# ----------------------------- driver ---------------------------------------
if __name__ == "__main__":
    key = jax.random.PRNGKey(0)
    kx, kw, kb, k2x, k2w, k3x, k3w, k3b = jax.random.split(key, 8)

    # --- check 1: Dense(32 -> 64, tanh, bias=True), default bf16 MXU feed ----
    B1, K1, N1 = 8, 32, 64
    x1 = jax.random.normal(kx, (B1, K1), dtype=jnp.float32)
    bound = 1.0 / (K1 ** 0.5)
    w1 = jax.random.uniform(kw, (N1, K1), minval=-bound, maxval=bound,
                            dtype=jnp.float32)
    b1 = jax.random.uniform(kb, (N1,), minval=-bound, maxval=bound,
                            dtype=jnp.float32)
    ref1 = jnp.tanh(x1 @ w1.T + b1)

    p1_bf16 = prepare_dense_params(w1, b1)                               # bf16 feed
    y1 = jax.block_until_ready(dense_apply(x1, p1_bf16, "tanh"))
    assert y1.shape == (B1, N1)
    assert jnp.allclose(y1, ref1, atol=2e-2, rtol=2e-2), "mismatch (tanh, bf16 feed)"

    p1_f32 = prepare_dense_params(w1, b1, compute_dtype=jnp.float32)     # exact path
    y1f = jax.block_until_ready(dense_apply(x1, p1_f32, "tanh"))
    assert jnp.allclose(y1f, ref1, atol=1e-5, rtol=1e-5), "mismatch (tanh, f32 feed)"

    # --- check 2: multi-step K reduction (K=640, tk=128 -> 5 K blocks), relu --
    B2, K2, N2 = 16, 640, 256
    x2 = jax.random.normal(k2x, (B2, K2), dtype=jnp.float32)
    w2 = jax.random.normal(k2w, (N2, K2), dtype=jnp.float32) * (1.0 / K2 ** 0.5)
    p2 = prepare_dense_params(w2, None, compute_dtype=jnp.float32)
    y2 = jax.block_until_ready(dense_apply(x2, p2, "relu", tk=128))
    ref2 = jnp.maximum(x2 @ w2.T, 0.0)
    assert y2.shape == (B2, N2)
    assert jnp.allclose(y2, ref2, atol=1e-4, rtol=1e-4), "mismatch (relu, K-tiled)"

    # --- check 3: awkward N=200 (padded to 256 lane-dense, sliced back) -------
    B3, K3, N3 = 16, 192, 200
    x3 = jax.random.normal(k3x, (B3, K3), dtype=jnp.float32)
    w3 = jax.random.normal(k3w, (N3, K3), dtype=jnp.float32) * (1.0 / K3 ** 0.5)
    b3 = jax.random.normal(k3b, (N3,), dtype=jnp.float32) * 0.1
    p3 = prepare_dense_params(w3, b3, compute_dtype=jnp.float32)
    y3 = jax.block_until_ready(dense_apply(x3, p3, "sigmoid"))
    ref3 = jax.nn.sigmoid(x3 @ w3.T + b3)
    assert y3.shape == (B3, N3)
    assert jnp.allclose(y3, ref3, atol=1e-4, rtol=1e-4), "mismatch (sigmoid, padded N)"

    print("KERNEL_OK")
</pallas_src>

<mosaic_0001>
module attributes {stable_mosaic.version = 11 : i64} {
  func.func @_dense_kernel(%arg0: i32, %arg1: i32, %arg2: i32, %arg3: memref<8x32xf32, #tpu.memory_space<vmem>>, %arg4: memref<32x64xbf16, #tpu.memory_space<vmem>>, %arg5: memref<1x64xf32, #tpu.memory_space<vmem>>, %arg6: memref<8x64xf32, #tpu.memory_space<vmem>>) attributes {dimension_semantics = [#tpu.dimension_semantics<parallel>, #tpu.dimension_semantics<parallel>, #tpu.dimension_semantics<arbitrary>], iteration_bounds = array<i64: 1, 1, 1>, scalar_prefetch = 0 : i64, scratch_operands = 0 : i64, tpu.core_type = #tpu.core_type<tc>, window_params = [{transform_indices = @transform_0, window_bounds = array<i64: 8, 32>}, {transform_indices = @transform_1, window_bounds = array<i64: 32, 64>}, {transform_indices = @transform_2, window_bounds = array<i64: 1, 64>}, {transform_indices = @transform_3, window_bounds = array<i64: 8, 64>}]} {
    %c0 = arith.constant 0 : index
    %c0_0 = arith.constant 0 : index
    %0 = vector.load %arg3[%c0, %c0_0] : memref<8x32xf32, #tpu.memory_space<vmem>>, vector<8x32xf32>
    %c0_1 = arith.constant 0 : index
    %c0_2 = arith.constant 0 : index
    %1 = vector.load %arg4[%c0_1, %c0_2] : memref<32x64xbf16, #tpu.memory_space<vmem>>, vector<32x64xbf16>
    %2 = arith.truncf %0 : vector<8x32xf32> to vector<8x32xbf16>
    %cst = arith.constant dense<0.000000e+00> : vector<8x64xf32>
    %3 = tpu.matmul %2, %1, %cst {dimension_numbers = #tpu.dot_dimension_numbers<[1], [0], [0], [1], [0, 0, 1, 1], [], []>} : vector<8x32xbf16>, vector<32x64xbf16>, vector<8x64xf32> -> vector<8x64xf32>
    %c0_3 = arith.constant 0 : index
    %c0_4 = arith.constant 0 : index
    %4 = vector.load %arg5[%c0_3, %c0_4] : memref<1x64xf32, #tpu.memory_space<vmem>>, vector<1x64xf32>
    %5 = vector.broadcast %4 : vector<1x64xf32> to vector<8x64xf32>
    %6 = arith.addf %3, %5 : vector<8x64xf32>
    %7 = math.tanh %6 : vector<8x64xf32>
    %c0_5 = arith.constant 0 : index
    %c0_6 = arith.constant 0 : index
    %8 = vector.load %arg6[%c0_5, %c0_6] : memref<8x64xf32, #tpu.memory_space<vmem>>, vector<8x64xf32>
    tpu.vector_store %arg6[%c0_5, %c0_6], %7 {strides = array<i32>} : memref<8x64xf32, #tpu.memory_space<vmem>>, vector<8x64xf32>,
    return
  }
  func.func @transform_0(%arg0: i32, %arg1: i32, %arg2: i32) -> (i32, i32) {
    %c0_i32 = arith.constant 0 : i32
    return %arg0, %arg2 : i32, i32
  }
  func.func @transform_1(%arg0: i32, %arg1: i32, %arg2: i32) -> (i32, i32) {
    %c0_i32 = arith.constant 0 : i32
    return %arg2, %arg1 : i32, i32
  }
  func.func @transform_2(%arg0: i32, %arg1: i32, %arg2: i32) -> (i32, i32) {
    %c0_i32 = arith.constant 0 : i32
    %c0_i32_0 = arith.constant 0 : i32
    return %c0_i32, %arg1 : i32, i32
  }
  func.func @transform_3(%arg0: i32, %arg1: i32, %arg2: i32) -> (i32, i32) {
    %c0_i32 = arith.constant 0 : i32
    return %arg0, %arg1 : i32, i32
  }
}

</mosaic_0001>

<llo_original>
// kernel: tpu_custom_call.1
$region0: #{tpu_custom_call.1}
  #allocation0 [shape = 'u32[]', space=smem, size = 0x4, offset = 0x4, fixed_abs, tag = 'smem constant byte address 0x4 - core index']
  #allocation1 [shape = 'u32[144,128]{1,0:T(1,128)}', space=vmem, size = 0x12000, scoped, tag = 'internal scratch']
  %s0 = inlined_call_operand.hbm [shape: f32[8,32], index: 0, kind: input, shape index: {}]
  %s1 = inlined_call_operand.hbm [shape: bf16[32,64], index: 1, kind: input, shape index: {}]
  %s2 = inlined_call_operand.vmem [shape: f32[1,64], index: 2, kind: input, shape index: {}]
  %s3 = inlined_call_operand.hbm [shape: f32[8,64], index: 3, kind: output, shape index: {}]
  %s4 = sld [smem:[#allocation0]]
  $region30: #{tpu_custom_call.1} parent=0
    _
  %s6 = ssub.s32 1, %s4
  %s7 = scalar_select 0, %s6, %s4
  $region1: #{tpu_custom_call.1} parent=0
    #allocation2 [shape = 'u8[4096]{0}', space=vmem, size = 0x1000, scoped, tag = 'input window, operand 0, single buffered']
    #allocation3 [shape = 's32[1]{0}', space=sflag, size = 0x4, scoped, tag = 'scoped memory for tpu_custom_call.1']
    #allocation4 [shape = 's32[1]{0}', space=sflag, size = 0x4, scoped, tag = 'scoped memory for tpu_custom_call.1']
    #allocation5 [shape = 'u8[8192]{0}', space=vmem, size = 0x2000, scoped, tag = 'input window, operand 1, single buffered']
    #allocation6 [shape = 's32[1]{0}', space=sflag, size = 0x4, scoped, tag = 'scoped memory for tpu_custom_call.1']
    #allocation7 [shape = 'u8[4096]{0}', space=vmem, size = 0x1000, scoped, tag = 'output window, operand 0, single buffered']
    %8 = vsyncpa [#allocation3], 0
    %9 = vsyncpa [#allocation6], 0
    %10 = vsyncpa [#allocation4], 0
    // Predicated region
    $region2: #{tpu_custom_call.1} parent=1 // pred_check
      _
    $region3: #{tpu_custom_call.1} parent=1 // pred_check_branch
      %12 = sbr.rel (0) target = $region5
    $region4: #{tpu_custom_call.1} parent=1 // pred_region
      %s14 = ssub.s32 128, 128
      %15 = vsyncadd [#allocation3], %s14
      %s17 = sshll.u32 [#allocation2], 4
      %s18 = int_to_ptr.vmem [resolvable:$true] %s17
      %20 = dma.hbm_to_vmem [thread:$0]  %s0, 128, %s18, [#allocation3]
    $region5: #{tpu_custom_call.1} parent=1 // pred_fallthru
      _
    // Predicated region
    $region6: #{tpu_custom_call.1} parent=1 // pred_check
      _
    $region7: #{tpu_custom_call.1} parent=1 // pred_check_branch
      %22 = sbr.rel (0) target = $region9
    $region8: #{tpu_custom_call.1} parent=1 // pred_region
      %s24 = ssub.s32 256, 256
      %25 = vsyncadd [#allocation6], %s24
      %s26 = sshll.u32 [#allocation5], 4
      %s27 = int_to_ptr.vmem [resolvable:$true] %s26
      %32 = dma.hbm_to_vmem [thread:$0]  %s1, 256, %s27, [#allocation6], 64, 64, 4
    $region9: #{tpu_custom_call.1} parent=1 // pred_fallthru
      _
    // Predicated region
    $region10: #{tpu_custom_call.1} parent=1 // pred_check
      _
    $region11: #{tpu_custom_call.1} parent=1 // pred_check_branch
      %34 = sbr.rel (0) target = $region13
    $region12: #{tpu_custom_call.1} parent=1 // pred_region
      _
    $region13: #{tpu_custom_call.1} parent=1 // pred_fallthru
      _
    // Predicated region
    $region14: #{tpu_custom_call.1} parent=1 // pred_check
      _
    $region15: #{tpu_custom_call.1} parent=1 // pred_check_branch
      %36 = sbr.rel (0) target = $region17
    $region16: #{tpu_custom_call.1} parent=1 // pred_region
      %37 = dma.done [#allocation3], 128
    $region17: #{tpu_custom_call.1} parent=1 // pred_fallthru
      _
    // Predicated region
    $region18: #{tpu_custom_call.1} parent=1 // pred_check
      _
    $region19: #{tpu_custom_call.1} parent=1 // pred_check_branch
      %39 = sbr.rel (0) target = $region21
    $region20: #{tpu_custom_call.1} parent=1 // pred_region
      %40 = dma.done [#allocation6], 256
    $region21: #{tpu_custom_call.1} parent=1 // pred_fallthru
      _
    %v42 = vld [vmem:[#allocation2] sm:$0xff]
    %v43 = vld [vmem:[#allocation5] sm:$0xf]
    %v44 = vld [vmem:[#allocation5 + $0x4] sm:$0xf]
    %v45 = vld [vmem:[#allocation5 + $0x8] sm:$0xf]
    %v46 = vld [vmem:[#allocation5 + $0xc] sm:$0xf]
    %v47 = vpack.c.bf16 %v42, %v42
    %v48 = vld [vmem:[%s2] sm:$0x1]
    %v50 = vlaneseq
    %v51 = vshrl.u32 %v50, 7
    %v52 = vsub.s32 0, %v51
    %v53 = vrot.slane %v48, %v52
    %v59 = vunpack.c.l.b16 %v43
    %v60 = vunpack.c.l.b16 %v44
    %v61 = vunpack.c.l.b16 %v45
    %v62 = vunpack.c.l.b16 %v46
    %v63 = vpack.c.b16 %v60, %v59
    %v64 = vpack.c.b16 %v62, %v61
    %vm67 = vcmask 261120
    %v69 = vsel %vm67, %v47, 0
    %71 = vmatprep.subr.bf16.mxu0 0
    %72 = vmatpush1.bf16.msra.mxu0 %v63
    %73 = vmatprep.subr.bf16.mxu0 0
    %74 = vmatpush1.bf16.msra.mxu0 %v64
    %75 = vmatprep.subr.bf16.mxu0 0
    %76 = vmatpush1.bf16.msra.mxu0 0
    %77 = vmatprep.subr.bf16.mxu0 0
    %78 = vmatpush1.bf16.msra.mxu0 0
    %79 = vmatprep.subr.bf16.mxu0 0
    %80 = vmatpush1.bf16.msra.mxu0 0
    %81 = vmatprep.subr.bf16.mxu0 0
    %82 = vmatpush1.bf16.msra.mxu0 0
    %83 = vmatprep.subr.bf16.mxu0 0
    %84 = vmatpush1.bf16.msra.mxu0 0
    %85 = vmatprep.subr.bf16.mxu0 0
    %86 = vmatpush1.bf16.msra.mxu0 0
    %87 = vmatprep.subr.bf16.mxu0 0
    %88 = vmatpush1.bf16.msra.mxu0 0
    %89 = vmatprep.subr.bf16.mxu0 0
    %90 = vmatpush1.bf16.msra.mxu0 0
    %91 = vmatprep.subr.bf16.mxu0 0
    %92 = vmatpush1.bf16.msra.mxu0 0
    %93 = vmatprep.subr.bf16.mxu0 0
    %94 = vmatpush1.bf16.msra.mxu0 0
    %95 = vmatprep.subr.bf16.mxu0 0
    %96 = vmatpush1.bf16.msra.mxu0 0
    %97 = vmatprep.subr.bf16.mxu0 0
    %98 = vmatpush1.bf16.msra.mxu0 0
    %99 = vmatprep.subr.bf16.mxu0 0
    %100 = vmatpush1.bf16.msra.mxu0 0
    %101 = vmatprep.subr.bf16.mxu0 0
    %102 = vmatpush1.bf16.msra.mxu0 0
    %103 = vmatprep.mubr.bf16.mxu0 0
    %104 = vmatmul.mubr.bf16.gmra.mrb[0].mxu0 %v69
    %v105 = vpop.f32.mrb[0].mxu0
    %v106 = vadd.f32 %v53, %v105
    %v107 = vpop.f32.mrb[0].mxu0
    %v108 = vpop.f32.mrb[0].mxu0
    %v109 = vpop.f32.mrb[0].mxu0
    %110 = vdwg.mxu0
    %v111 = vtanh.pop %v106
    %vm112 = vcmask 523264
    %113 = vst.msk [vmem:[#allocation7] sm:$0xff] %vm112, %v111
    // Predicated region
    $region22: #{tpu_custom_call.1} parent=1 // pred_check
      _
    $region23: #{tpu_custom_call.1} parent=1 // pred_check_branch
      %115 = sbr.rel (0) target = $region25
    $region24: #{tpu_custom_call.1} parent=1 // pred_region
      %s117 = ssub.s32 128, 128
      %118 = vsyncadd [#allocation4], %s117
      %s120 = sshll.u32 [#allocation7], 4
      %s121 = int_to_ptr.vmem [resolvable:$true] %s120
      %123 = dma.vmem_to_hbm [thread:$0]  %s121, 128, %s3, [#allocation4]
    $region25: #{tpu_custom_call.1} parent=1 // pred_fallthru
      _
    // Predicated region
    $region26: #{tpu_custom_call.1} parent=1 // pred_check
      _
    $region27: #{tpu_custom_call.1} parent=1 // pred_check_branch
      %125 = sbr.rel (0) target = $region29
    $region28: #{tpu_custom_call.1} parent=1 // pred_region
      %126 = dma.done [#allocation4], 128
    $region29: #{tpu_custom_call.1} parent=1 // pred_fallthru
      _
    %127 = vsyncpa [#allocation3], 1
    %128 = vsyncpa [#allocation6], 1
    %129 = vsyncpa [#allocation4], 1

</llo_original>
